<compile_context>
chip_gen: v5e
topology: v5e:2x2
jax: 0.10.0
libtpu: 0.0.40
codegen_flags: <defaults>
</compile_context>

<pallas_src>
import functools

import jax
import jax.numpy as jnp
from jax.experimental import pallas as pl
from jax.experimental.pallas import tpu as pltpu


def _round_up(a, b):
    return ((a + b - 1) // b) * b


def adapter_router_kernel(x_ref, wd_ref, bd_ref, wu_ref, bu_ref, o_ref):
    """Fused two-adapter forward for one M-tile: o = relu(x @ wd + bd) @ wu + bu."""
    x = x_ref[...]
    d = jnp.dot(x, wd_ref[...], preferred_element_type=jnp.float32)
    d = jnp.maximum(d + bd_ref[...].astype(jnp.float32), 0.0)
    o = jnp.dot(d.astype(wu_ref.dtype), wu_ref[...],
                preferred_element_type=jnp.float32)
    o_ref[...] = (o + bu_ref[...].astype(jnp.float32)).astype(o_ref.dtype)


def _vmem_estimate(tm, D, bn2, itemsize):
    """VMEM footprint for one M-tile (double-buffered I/O + resident weights + scratch)."""
    io_tiles = 2 * 2 * tm * D * itemsize                      # x + out, 2 buffers each
    weights = 2 * (D * bn2 + bn2 * D + bn2 + D) * itemsize    # weights/biases, 2 buffers
    inter = tm * bn2 * 4 + tm * bn2 * itemsize + tm * D * 4   # d(f32) + cast copy + o(f32)
    return io_tiles + weights + inter


def _vmem_capacity_bytes():
    try:
        return int(pltpu.get_tpu_info().vmem_capacity_bytes)
    except Exception:  # pragma: no cover - conservative fallback (v7x per-TC VMEM)
        return 64 * 2 ** 20


def _num_tensorcores():
    """TensorCores per chip: 2 on v7x, 1 on v5e/v6e."""
    kind = str(getattr(jax.devices()[0], "device_kind", "")).lower()
    return 2 if "v7" in kind else 1


def _choose_tm(M, D, bn2, itemsize, budget, min_steps):
    """Largest M-tile (<=16384 rows) fitting the VMEM budget, capped by M, >=min_steps grid."""
    gran = 16 if itemsize < 4 else 8          # sublane granularity (bf16 packs 2 rows/sublane)
    best, tm = gran, gran
    while tm <= 16384:
        if _vmem_estimate(tm, D, bn2, itemsize) <= budget:
            best = tm
        tm *= 2
    best = min(best, _round_up(M, gran))
    # v7x: make sure the 'parallel' grid axis has work for every TensorCore.
    while min_steps > 1 and best > gran and pl.cdiv(M, best) < min_steps:
        best = max(gran, _round_up(best // 2, gran))
    return best


@functools.partial(jax.jit, static_argnames=("stream_dtype",))
def adapter_router_forward(x, params, router_idx, *, stream_dtype=jnp.bfloat16):
    """x: [B, S, D].  params: dict of weights (see make_params).  router_idx: 0 or 1."""
    B, S, D = x.shape
    M = B * S
    bn = params["wd1"].shape[1]
    bn2 = 2 * bn

    # ---- wrapper glue: router gather + fold scale/ratio into the up projection (in f32) ----
    r1 = params["router_ratio1"][router_idx]          # (D,)
    r2 = params["router_ratio2"][router_idx]          # (D,)
    s1 = params["scale1"][0, 0]
    s2 = params["scale2"][0, 0]

    wd = jnp.concatenate([params["wd1"], params["wd2"]], axis=1)                  # (D, 2bn)
    bd = jnp.concatenate([params["bd1"], params["bd2"]], axis=1)                  # (1, 2bn)
    wu = jnp.concatenate([params["wu1"] * (s1 * r1)[None, :],
                          params["wu2"] * (s2 * r2)[None, :]], axis=0)            # (2bn, D)
    bu = params["bu1"] * (s1 * r1)[None, :] + params["bu2"] * (s2 * r2)[None, :]  # (1, D)

    # bf16 streaming (kernel is HBM-bound): cast operands once; MXU accumulation stays f32.
    x2 = x.reshape(M, D).astype(stream_dtype)
    wd = wd.astype(stream_dtype)
    bd = bd.astype(stream_dtype)
    wu = wu.astype(stream_dtype)
    bu = bu.astype(stream_dtype)

    # ---- per-generation tile sizing (v7x: 64 MiB per-TC VMEM, v5e/v6e: 128 MiB) ----
    itemsize = jnp.dtype(stream_dtype).itemsize
    phys_vmem = _vmem_capacity_bytes()
    n_tc = _num_tensorcores()
    tm = _choose_tm(M, D, bn2, itemsize, budget=int(phys_vmem * 0.55), min_steps=n_tc)

    vmem_limit = int(min(phys_vmem,
                         max(32 * 2 ** 20,
                             int(_vmem_estimate(tm, D, bn2, itemsize) * 1.5))))

    grid = (pl.cdiv(M, tm),)   # partial last tile: loads clipped, stores masked by Pallas

    def resident(shape):
        # whole-array block, constant index_map -> logically resident across the grid
        return pl.BlockSpec(shape, lambda i: (0, 0))

    out2 = pl.pallas_call(
        adapter_router_kernel,
        out_shape=jax.ShapeDtypeStruct((M, D), stream_dtype),
        grid_spec=pl.GridSpec(
            grid=grid,
            in_specs=[
                pl.BlockSpec((tm, D), lambda i: (i, 0)),    # x tile
                resident((D, bn2)),                          # wd  = [wd1 | wd2]
                resident((1, bn2)),                          # bd  = [bd1 | bd2]
                resident((bn2, D)),                          # wu  (scale & router folded)
                resident((1, D)),                            # bu  (scale & router folded)
            ],
            out_specs=pl.BlockSpec((tm, D), lambda i: (i, 0)),
        ),
        compiler_params=pltpu.CompilerParams(
            dimension_semantics=("parallel",),
            vmem_limit_bytes=vmem_limit,
        ),
    )(x2, wd, bd, wu, bu)

    return out2.reshape(B, S, D)


def make_params(key, d_model, bottleneck):
    """Deterministic synthetic parameters.

    Note: the reference module's 'lora' init zeroes up_proj.weight, which would make the
    output trivially zero; we use small random values instead so the kernel is exercised,
    while keeping shapes/semantics identical.
    """
    ks = jax.random.split(key, 6)
    params = {
        # stored as (in, out) = PyTorch weight.T
        "wd1": jax.random.normal(ks[0], (d_model, bottleneck), jnp.float32) * 0.05,
        "bd1": jax.random.normal(ks[1], (1, bottleneck), jnp.float32) * 0.01,
        "wu1": jax.random.normal(ks[2], (bottleneck, d_model), jnp.float32) * 0.05,
        "bu1": jax.random.normal(ks[3], (1, d_model), jnp.float32) * 0.01,
        "scale1": jnp.ones((1, 1), jnp.float32),
        "wd2": jax.random.normal(ks[4], (d_model, bottleneck), jnp.float32) * 0.05,
        "bd2": jnp.zeros((1, bottleneck), jnp.float32),
        "wu2": jax.random.normal(ks[5], (bottleneck, d_model), jnp.float32) * 0.05,
        "bu2": jnp.zeros((1, d_model), jnp.float32),
        "scale2": jnp.ones((1, 1), jnp.float32),
        # router: row 0 -> all adapter-0, row 1 -> all adapter-1 (as in the module init)
        "router_ratio1": jnp.stack([jnp.ones((d_model,), jnp.float32),
                                    jnp.zeros((d_model,), jnp.float32)]),
        "router_ratio2": jnp.stack([jnp.zeros((d_model,), jnp.float32),
                                    jnp.ones((d_model,), jnp.float32)]),
    }
    return params


def reference_forward(x, params, router_idx):
    """Plain-JAX reference mirroring the PyTorch module forward (f32 throughout)."""
    def adapter(x, wd, bd, wu, bu, scale):
        d = jnp.maximum(x @ wd + bd, 0.0)          # down + ReLU (dropout p=0 -> no-op)
        return (d @ wu + bu) * scale[0, 0]
    o1 = adapter(x, params["wd1"], params["bd1"], params["wu1"], params["bu1"], params["scale1"])
    o2 = adapter(x, params["wd2"], params["bd2"], params["wu2"], params["bu2"], params["scale2"])
    r1 = params["router_ratio1"][router_idx]
    r2 = params["router_ratio2"][router_idx]
    return o1 * r1 + o2 * r2


if __name__ == "__main__":
    d_model = 128        # multiple of 128 -> lane-dense blocks
    bottleneck = 64      # fused 2*bn = 128 -> full-lane MXU operand
    key = jax.random.PRNGKey(0)
    kx, kp, kx2 = jax.random.split(key, 3)
    params = make_params(kp, d_model, bottleneck)

    # Case 1: default bf16 streaming path, both router settings.
    batch, seq = 2, 8
    x = jax.random.normal(kx, (batch, seq, d_model), jnp.float32)
    for router_idx in (0, 1):
        out = jax.block_until_ready(adapter_router_forward(x, params, router_idx))
        ref = reference_forward(x, params, router_idx)
        assert out.shape == (batch, seq, d_model)
        assert out.dtype == jnp.bfloat16
        assert jnp.allclose(out.astype(jnp.float32), ref, atol=5e-2, rtol=5e-2), \
            f"mismatch vs reference (bf16, router_idx={router_idx})"

    # Case 2: f32 path (exact module dtype semantics) with M = 15, i.e. NOT a multiple of
    # the tile -> exercises the masked partial-tile path (no pad/unpad copies).
    batch2, seq2 = 3, 5
    xb = jax.random.normal(kx2, (batch2, seq2, d_model), jnp.float32)
    out2 = jax.block_until_ready(
        adapter_router_forward(xb, params, 1, stream_dtype=jnp.float32))
    ref2 = reference_forward(xb, params, 1)
    assert out2.shape == (batch2, seq2, d_model)
    assert out2.dtype == jnp.float32
    assert jnp.allclose(out2, ref2, atol=1e-2, rtol=1e-2), "mismatch vs reference (f32)"

    print("KERNEL_OK")
</pallas_src>

<mosaic_0001>
module attributes {stable_mosaic.version = 11 : i64} {
  func.func @adapter_router_kernel(%arg0: i32, %arg1: memref<16x128xbf16, #tpu.memory_space<vmem>>, %arg2: memref<128x128xbf16, #tpu.memory_space<vmem>>, %arg3: memref<1x128xbf16, #tpu.memory_space<vmem>>, %arg4: memref<128x128xbf16, #tpu.memory_space<vmem>>, %arg5: memref<1x128xbf16, #tpu.memory_space<vmem>>, %arg6: memref<16x128xbf16, #tpu.memory_space<vmem>>) attributes {dimension_semantics = [#tpu.dimension_semantics<parallel>], iteration_bounds = array<i64: 1>, scalar_prefetch = 0 : i64, scratch_operands = 0 : i64, tpu.core_type = #tpu.core_type<tc>, window_params = [{transform_indices = @transform_0, window_bounds = array<i64: 16, 128>}, {pipeline_mode = #tpu.pipeline_mode<synchronous>, transform_indices = @transform_1, window_bounds = array<i64: 128, 128>}, {pipeline_mode = #tpu.pipeline_mode<synchronous>, transform_indices = @transform_2, window_bounds = array<i64: 1, 128>}, {pipeline_mode = #tpu.pipeline_mode<synchronous>, transform_indices = @transform_3, window_bounds = array<i64: 128, 128>}, {pipeline_mode = #tpu.pipeline_mode<synchronous>, transform_indices = @transform_4, window_bounds = array<i64: 1, 128>}, {transform_indices = @transform_5, window_bounds = array<i64: 16, 128>}]} {
    %c0 = arith.constant 0 : index
    %c0_0 = arith.constant 0 : index
    %0 = vector.load %arg1[%c0, %c0_0] : memref<16x128xbf16, #tpu.memory_space<vmem>>, vector<16x128xbf16>
    %c0_1 = arith.constant 0 : index
    %c0_2 = arith.constant 0 : index
    %1 = vector.load %arg2[%c0_1, %c0_2] : memref<128x128xbf16, #tpu.memory_space<vmem>>, vector<128x128xbf16>
    %cst = arith.constant dense<0.000000e+00> : vector<16x128xf32>
    %2 = tpu.matmul %0, %1, %cst {dimension_numbers = #tpu.dot_dimension_numbers<[1], [0], [0], [1], [0, 0, 1, 1], [], []>} : vector<16x128xbf16>, vector<128x128xbf16>, vector<16x128xf32> -> vector<16x128xf32>
    %c0_3 = arith.constant 0 : index
    %c0_4 = arith.constant 0 : index
    %3 = vector.load %arg3[%c0_3, %c0_4] : memref<1x128xbf16, #tpu.memory_space<vmem>>, vector<1x128xbf16>
    %4 = arith.extf %3 : vector<1x128xbf16> to vector<1x128xf32>
    %5 = vector.broadcast %4 : vector<1x128xf32> to vector<16x128xf32>
    %6 = arith.addf %2, %5 : vector<16x128xf32>
    %cst_5 = arith.constant 0.000000e+00 : f32
    %7 = vector.broadcast %cst_5 : f32 to vector<16x128xf32>
    %8 = arith.maximumf %6, %7 : vector<16x128xf32>
    %9 = arith.truncf %8 : vector<16x128xf32> to vector<16x128xbf16>
    %c0_6 = arith.constant 0 : index
    %c0_7 = arith.constant 0 : index
    %10 = vector.load %arg4[%c0_6, %c0_7] : memref<128x128xbf16, #tpu.memory_space<vmem>>, vector<128x128xbf16>
    %cst_8 = arith.constant dense<0.000000e+00> : vector<16x128xf32>
    %11 = tpu.matmul %9, %10, %cst_8 {dimension_numbers = #tpu.dot_dimension_numbers<[1], [0], [0], [1], [0, 0, 1, 1], [], []>} : vector<16x128xbf16>, vector<128x128xbf16>, vector<16x128xf32> -> vector<16x128xf32>
    %c0_9 = arith.constant 0 : index
    %c0_10 = arith.constant 0 : index
    %12 = vector.load %arg5[%c0_9, %c0_10] : memref<1x128xbf16, #tpu.memory_space<vmem>>, vector<1x128xbf16>
    %13 = arith.extf %12 : vector<1x128xbf16> to vector<1x128xf32>
    %14 = vector.broadcast %13 : vector<1x128xf32> to vector<16x128xf32>
    %15 = arith.addf %11, %14 : vector<16x128xf32>
    %16 = arith.truncf %15 : vector<16x128xf32> to vector<16x128xbf16>
    %c0_11 = arith.constant 0 : index
    %c0_12 = arith.constant 0 : index
    %17 = vector.load %arg6[%c0_11, %c0_12] : memref<16x128xbf16, #tpu.memory_space<vmem>>, vector<16x128xbf16>
    tpu.vector_store %arg6[%c0_11, %c0_12], %16 {strides = array<i32>} : memref<16x128xbf16, #tpu.memory_space<vmem>>, vector<16x128xbf16>,
    return
  }
  func.func @transform_0(%arg0: i32) -> (i32, i32) {
    %c0_i32 = arith.constant 0 : i32
    %c0_i32_0 = arith.constant 0 : i32
    return %arg0, %c0_i32 : i32, i32
  }
  func.func @transform_1(%arg0: i32) -> (i32, i32) {
    %c0_i32 = arith.constant 0 : i32
    %c0_i32_0 = arith.constant 0 : i32
    %c0_i32_1 = arith.constant 0 : i32
    return %c0_i32, %c0_i32_0 : i32, i32
  }
  func.func @transform_2(%arg0: i32) -> (i32, i32) {
    %c0_i32 = arith.constant 0 : i32
    %c0_i32_0 = arith.constant 0 : i32
    %c0_i32_1 = arith.constant 0 : i32
    return %c0_i32, %c0_i32_0 : i32, i32
  }
  func.func @transform_3(%arg0: i32) -> (i32, i32) {
    %c0_i32 = arith.constant 0 : i32
    %c0_i32_0 = arith.constant 0 : i32
    %c0_i32_1 = arith.constant 0 : i32
    return %c0_i32, %c0_i32_0 : i32, i32
  }
  func.func @transform_4(%arg0: i32) -> (i32, i32) {
    %c0_i32 = arith.constant 0 : i32
    %c0_i32_0 = arith.constant 0 : i32
    %c0_i32_1 = arith.constant 0 : i32
    return %c0_i32, %c0_i32_0 : i32, i32
  }
  func.func @transform_5(%arg0: i32) -> (i32, i32) {
    %c0_i32 = arith.constant 0 : i32
    %c0_i32_0 = arith.constant 0 : i32
    return %arg0, %c0_i32 : i32, i32
  }
}

</mosaic_0001>

<llo_original>
// kernel: adapter_router_forward.1
$region0: #{adapter_router_forward.1}
  #allocation0 [shape = 'u32[]', space=smem, size = 0x4, offset = 0x4, fixed_abs, tag = 'smem constant byte address 0x4 - core index']
  #allocation1 [shape = 'u32[72,128]{1,0:T(1,128)}', space=vmem, size = 0x9000, scoped, tag = 'internal scratch']
  %s0 = inlined_call_operand.vmem [shape: bf16[16,128], index: 0, kind: input, shape index: {}]
  %s1 = inlined_call_operand.vmem [shape: bf16[128,128], index: 1, kind: input, shape index: {}]
  %s2 = inlined_call_operand.vmem [shape: bf16[1,128], index: 2, kind: input, shape index: {}]
  %s3 = inlined_call_operand.vmem [shape: bf16[128,128], index: 3, kind: input, shape index: {}]
  %s4 = inlined_call_operand.vmem [shape: bf16[1,128], index: 4, kind: input, shape index: {}]
  %s5 = inlined_call_operand.hbm [shape: bf16[16,128], index: 5, kind: output, shape index: {}]
  %s6 = sld [smem:[#allocation0]]
  $region30: #{adapter_router_forward.1} parent=0
    _
  %s8 = ssub.s32 1, %s6
  %s9 = scalar_select 0, %s8, %s6
  $region1: #{adapter_router_forward.1} parent=0
    #allocation2 [shape = 'u8[4096]{0}', space=vmem, size = 0x1000, scoped, tag = 'output window, operand 0, single buffered']
    #allocation3 [shape = 's32[1]{0}', space=sflag, size = 0x4, scoped, tag = 'scoped memory for adapter_router_forward.1']
    %10 = vsyncpa [#allocation3], 0
    // Predicated region
    $region2: #{adapter_router_forward.1} parent=1 // pred_check
      _
    $region3: #{adapter_router_forward.1} parent=1 // pred_check_branch
      %12 = sbr.rel (0) target = $region5
    $region4: #{adapter_router_forward.1} parent=1 // pred_region
      _
    $region5: #{adapter_router_forward.1} parent=1 // pred_fallthru
      _
    // Predicated region
    $region6: #{adapter_router_forward.1} parent=1 // pred_check
      _
    $region7: #{adapter_router_forward.1} parent=1 // pred_check_branch
      %14 = sbr.rel (0) target = $region9
    $region8: #{adapter_router_forward.1} parent=1 // pred_region
      _
    $region9: #{adapter_router_forward.1} parent=1 // pred_fallthru
      _
    // Predicated region
    $region10: #{adapter_router_forward.1} parent=1 // pred_check
      _
    $region11: #{adapter_router_forward.1} parent=1 // pred_check_branch
      %16 = sbr.rel (0) target = $region13
    $region12: #{adapter_router_forward.1} parent=1 // pred_region
      _
    $region13: #{adapter_router_forward.1} parent=1 // pred_fallthru
      _
    // Predicated region
    $region14: #{adapter_router_forward.1} parent=1 // pred_check
      _
    $region15: #{adapter_router_forward.1} parent=1 // pred_check_branch
      %18 = sbr.rel (0) target = $region17
    $region16: #{adapter_router_forward.1} parent=1 // pred_region
      _
    $region17: #{adapter_router_forward.1} parent=1 // pred_fallthru
      _
    // Predicated region
    $region18: #{adapter_router_forward.1} parent=1 // pred_check
      _
    $region19: #{adapter_router_forward.1} parent=1 // pred_check_branch
      %20 = sbr.rel (0) target = $region21
    $region20: #{adapter_router_forward.1} parent=1 // pred_region
      _
    $region21: #{adapter_router_forward.1} parent=1 // pred_fallthru
      _
    %v21 = vld [vmem:[%s0] sm:$0xf]
    %v22 = vld [vmem:[%s0 + $0x4] sm:$0xf]
    %v23 = vld [vmem:[%s1] sm:$0xf]
    %v24 = vld [vmem:[%s1 + $0x4] sm:$0xf]
    %v25 = vld [vmem:[%s1 + $0x8] sm:$0xf]
    %v26 = vld [vmem:[%s1 + $0xc] sm:$0xf]
    %v27 = vld [vmem:[%s1 + $0x10] sm:$0xf]
    %v28 = vld [vmem:[%s1 + $0x14] sm:$0xf]
    %v29 = vld [vmem:[%s1 + $0x18] sm:$0xf]
    %v30 = vld [vmem:[%s1 + $0x1c] sm:$0xf]
    %v31 = vld [vmem:[%s1 + $0x20] sm:$0xf]
    %v32 = vld [vmem:[%s1 + $0x24] sm:$0xf]
    %v33 = vld [vmem:[%s1 + $0x28] sm:$0xf]
    %v34 = vld [vmem:[%s1 + $0x2c] sm:$0xf]
    %v35 = vld [vmem:[%s1 + $0x30] sm:$0xf]
    %v36 = vld [vmem:[%s1 + $0x34] sm:$0xf]
    %v37 = vld [vmem:[%s1 + $0x38] sm:$0xf]
    %v38 = vld [vmem:[%s1 + $0x3c] sm:$0xf]
    %v39 = vld [vmem:[%s2] sm:$0x1]
    %v40 = vunpack.c.l.bf16 %v39
    %v41 = vperm.slane %v40, 0
    %v44 = vunpack.c.l.b16 %v21
    %v45 = vunpack.c.l.b16 %v22
    %v46 = vpack.c.b16 %v45, %v44
    %v64 = vunpack.c.l.b16 %v23
    %v65 = vunpack.c.l.b16 %v24
    %v66 = vunpack.c.l.b16 %v25
    %v67 = vunpack.c.l.b16 %v26
    %v68 = vunpack.c.l.b16 %v27
    %v69 = vunpack.c.l.b16 %v28
    %v70 = vunpack.c.l.b16 %v29
    %v71 = vunpack.c.l.b16 %v30
    %v72 = vunpack.c.l.b16 %v31
    %v73 = vunpack.c.l.b16 %v32
    %v74 = vunpack.c.l.b16 %v33
    %v75 = vunpack.c.l.b16 %v34
    %v76 = vunpack.c.l.b16 %v35
    %v77 = vunpack.c.l.b16 %v36
    %v78 = vunpack.c.l.b16 %v37
    %v79 = vunpack.c.l.b16 %v38
    %v80 = vpack.c.b16 %v65, %v64
    %v81 = vpack.c.b16 %v67, %v66
    %v82 = vpack.c.b16 %v69, %v68
    %v83 = vpack.c.b16 %v71, %v70
    %v84 = vpack.c.b16 %v73, %v72
    %v85 = vpack.c.b16 %v75, %v74
    %v86 = vpack.c.b16 %v77, %v76
    %v87 = vpack.c.b16 %v79, %v78
    %96 = vmatpush.bf16.msra.mxu0 %v87
    %97 = vmatpush.bf16.msra.mxu0 %v86
    %98 = vmatpush.bf16.msra.mxu0 %v85
    %99 = vmatpush.bf16.msra.mxu0 %v84
    %100 = vmatpush.bf16.msra.mxu0 %v83
    %101 = vmatpush.bf16.msra.mxu0 %v82
    %102 = vmatpush.bf16.msra.mxu0 %v81
    %103 = vmatpush.bf16.msra.mxu0 %v80
    %104 = vmatmul.bf16.gmra.mxu0 %v46
    %v105 = vpop.f32.mrf.mxu0
    %v106 = vadd.f32 %v41, %v105
    %v107 = vpop.f32.mrf.mxu0
    %v108 = vadd.f32 %v41, %v107
    %109 = vdwg.mxu0
    %v110 = vmax.f32 %v106, 0.0
    %v111 = vmax.f32 %v108, 0.0
    %v112 = vpack.c.bf16 %v111, %v110
    %v113 = vld [vmem:[%s3] sm:$0xf]
    %v114 = vld [vmem:[%s3 + $0x4] sm:$0xf]
    %v115 = vld [vmem:[%s3 + $0x8] sm:$0xf]
    %v116 = vld [vmem:[%s3 + $0xc] sm:$0xf]
    %v117 = vld [vmem:[%s3 + $0x10] sm:$0xf]
    %v118 = vld [vmem:[%s3 + $0x14] sm:$0xf]
    %v119 = vld [vmem:[%s3 + $0x18] sm:$0xf]
    %v120 = vld [vmem:[%s3 + $0x1c] sm:$0xf]
    %v121 = vld [vmem:[%s3 + $0x20] sm:$0xf]
    %v122 = vld [vmem:[%s3 + $0x24] sm:$0xf]
    %v123 = vld [vmem:[%s3 + $0x28] sm:$0xf]
    %v124 = vld [vmem:[%s3 + $0x2c] sm:$0xf]
    %v125 = vld [vmem:[%s3 + $0x30] sm:$0xf]
    %v126 = vld [vmem:[%s3 + $0x34] sm:$0xf]
    %v127 = vld [vmem:[%s3 + $0x38] sm:$0xf]
    %v128 = vld [vmem:[%s3 + $0x3c] sm:$0xf]
    %v129 = vld [vmem:[%s4] sm:$0x1]
    %v130 = vunpack.c.l.bf16 %v129
    %v131 = vperm.slane %v130, 0
    %v148 = vunpack.c.l.b16 %v113
    %v149 = vunpack.c.l.b16 %v114
    %v150 = vunpack.c.l.b16 %v115
    %v151 = vunpack.c.l.b16 %v116
    %v152 = vunpack.c.l.b16 %v117
    %v153 = vunpack.c.l.b16 %v118
    %v154 = vunpack.c.l.b16 %v119
    %v155 = vunpack.c.l.b16 %v120
    %v156 = vunpack.c.l.b16 %v121
    %v157 = vunpack.c.l.b16 %v122
    %v158 = vunpack.c.l.b16 %v123
    %v159 = vunpack.c.l.b16 %v124
    %v160 = vunpack.c.l.b16 %v125
    %v161 = vunpack.c.l.b16 %v126
    %v162 = vunpack.c.l.b16 %v127
    %v163 = vunpack.c.l.b16 %v128
    %v164 = vpack.c.b16 %v149, %v148
    %v165 = vpack.c.b16 %v151, %v150
    %v166 = vpack.c.b16 %v153, %v152
    %v167 = vpack.c.b16 %v155, %v154
    %v168 = vpack.c.b16 %v157, %v156
    %v169 = vpack.c.b16 %v159, %v158
    %v170 = vpack.c.b16 %v161, %v160
    %v171 = vpack.c.b16 %v163, %v162
    %180 = vmatpush.bf16.msra.mxu0 %v171
    %181 = vmatpush.bf16.msra.mxu0 %v170
    %182 = vmatpush.bf16.msra.mxu0 %v169
    %183 = vmatpush.bf16.msra.mxu0 %v168
    %184 = vmatpush.bf16.msra.mxu0 %v167
    %185 = vmatpush.bf16.msra.mxu0 %v166
    %186 = vmatpush.bf16.msra.mxu0 %v165
    %187 = vmatpush.bf16.msra.mxu0 %v164
    %188 = vmatmul.bf16.gmra.mxu0 %v112
    %v189 = vpop.f32.mrf.mxu0
    %v190 = vadd.f32 %v131, %v189
    %v191 = vpop.f32.mrf.mxu0
    %v192 = vadd.f32 %v131, %v191
    %193 = vdwg.mxu0
    %v194 = vpack.c.bf16 %v190, %v190
    %v195 = vpack.c.bf16 %v192, %v192
    %196 = vst [vmem:[#allocation2] sm:$0xf] %v194
    %197 = vst [vmem:[#allocation2 + $0x4] sm:$0xf] %v195
    // Predicated region
    $region22: #{adapter_router_forward.1} parent=1 // pred_check
      _
    $region23: #{adapter_router_forward.1} parent=1 // pred_check_branch
      %199 = sbr.rel (0) target = $region25
    $region24: #{adapter_router_forward.1} parent=1 // pred_region
      %201 = vsyncadd [#allocation3], 0
      %s202 = sshll.u32 [#allocation2], 4
      %s203 = int_to_ptr.vmem [resolvable:$true] %s202
      %s204 = sshll.u32 %s5, 4
      %s205 = int_to_ptr.hbm [resolvable:$true] %s204
      %210 = dma.vmem_to_hbm [thread:$0]  %s203, 128, %s205, [#allocation3], 64, 64, 4
    $region25: #{adapter_router_forward.1} parent=1 // pred_fallthru
      _
    // Predicated region
    $region26: #{adapter_router_forward.1} parent=1 // pred_check
      _
    $region27: #{adapter_router_forward.1} parent=1 // pred_check_branch
      %212 = sbr.rel (0) target = $region29
    $region28: #{adapter_router_forward.1} parent=1 // pred_region
      %214 = dma.done [#allocation3], 128
    $region29: #{adapter_router_forward.1} parent=1 // pred_fallthru
      _
    %215 = vsyncpa [#allocation3], 1

</llo_original>
